<compile_context>
chip_gen: v5e
topology: v5e:2x2
jax: 0.10.0
libtpu: 0.0.40
codegen_flags: <defaults>
</compile_context>

<pallas_src>
import functools
import math

import jax
import jax.numpy as jnp
from jax import lax
from jax.experimental import pallas as pl
from jax.experimental.pallas import tpu as pltpu


def _mha_kernel(x_ref, pos_ref, wqt_ref, wkvt_ref, wot_ref, b_ref, o_ref,
                *, nhead, nb, L, S):
    E = wqt_ref.shape[0]
    hd = E // nhead

    b = b_ref[...]                     # (1, 4E) packed [bq*scale | bk | bv | bo]
    bq = b[:, :E]
    bkv = b[:, E:3 * E]
    bo = b[:, 3 * E:]

    # Collapse the leading batch dim: (nb, L, E) -> (nb*L, E). Leading/sublane
    # collapse, no relayout. Projections run once over the whole slab.
    x = x_ref[...].reshape(nb * L, E)
    pos = pos_ref[...].reshape(nb * S, E)

    # 1/sqrt(hd) is already folded into wq_t / bq by the wrapper -> q is pre-scaled.
    q = jnp.dot(x, wqt_ref[...], preferred_element_type=jnp.float32) + bq        # (nb*L, E)
    kv = jnp.dot(pos, wkvt_ref[...], preferred_element_type=jnp.float32) + bkv   # (nb*S, 2E)

    wot = wot_ref[...]                 # (E, E)

    # Per-(batch, head) attention with the output projection fused into the head
    # loop as an MXU accumulation: no ctx scratch, no lane-masked partial stores.
    # Loops are tiny (nb * nhead iterations) and fully unrolled at trace time.
    for bi in range(nb):
        qb = q[bi * L:(bi + 1) * L, :]           # (L, E)   static slice
        kvb = kv[bi * S:(bi + 1) * S, :]         # (S, 2E)  static slice
        acc = jnp.zeros((L, E), jnp.float32)
        for h in range(nhead):
            qh = qb[:, h * hd:(h + 1) * hd]              # (L, hd)
            kh = kvb[:, h * hd:(h + 1) * hd]             # (S, hd)
            vh = kvb[:, E + h * hd:E + (h + 1) * hd]     # (S, hd)
            # Contract the last dims directly (no explicit kh.T / XLU transpose).
            s = lax.dot_general(qh, kh, (((1,), (1,)), ((), ())),
                                preferred_element_type=jnp.float32)   # (L, S)
            s = s - jnp.max(s, axis=-1, keepdims=True)
            p = jnp.exp(s)
            denom = jnp.sum(p, axis=-1, keepdims=True)
            ctx = jnp.dot(p, vh, preferred_element_type=jnp.float32) / denom     # (L, hd)
            # Fused output projection: accumulate ctx_h @ Wo^T[h*hd:(h+1)*hd, :].
            acc = acc + jnp.dot(ctx, wot[h * hd:(h + 1) * hd, :],
                                preferred_element_type=jnp.float32)
        o_ref[bi] = (acc + bo).astype(o_ref.dtype)


def attention_fusion(x, pos, in_proj_w, in_proj_b, out_proj_w, out_proj_b, *,
                     nhead, batch_block=None):
    """x: (L, N, E), pos: (S, N, E) -> (L, N, E), matching nn.MultiheadAttention."""
    L, N, E = x.shape
    S = pos.shape[0]
    assert E % nhead == 0, "d_model must be divisible by nhead"
    hd = E // nhead
    scale = 1.0 / math.sqrt(hd)

    # Batch elements processed per grid step. Default: all of them (single step,
    # no per-step overhead). On v7x pass batch_block=N//2 (or smaller) to keep
    # >=2 "parallel" grid steps so both TensorCores stay busy.
    nb = N if batch_block is None else int(batch_block)
    assert N % nb == 0, "batch must divide evenly into batch blocks"

    wq, wk, wv = jnp.split(in_proj_w, 3, axis=0)      # each (E, E)
    bq, bk, bv = jnp.split(in_proj_b, 3, axis=0)      # each (E,)

    # Fold the softmax scale into the static query projection (one-time cost).
    wq_t = wq.T * scale                               # (E, E)
    wkv_t = jnp.concatenate([wk.T, wv.T], axis=1)     # (E, 2E) fused K/V projection
    wo_t = out_proj_w.T                               # (E, E)
    b_all = jnp.concatenate([bq * scale, bk, bv, out_proj_b]).reshape(1, 4 * E)

    # Batch-major layout for contiguous per-block DMAs (see TODO above re:
    # eliminating these transposes at production shapes).
    xb = jnp.transpose(x, (1, 0, 2))                  # (N, L, E)
    pb = jnp.transpose(pos, (1, 0, 2))                # (N, S, E)

    kernel = functools.partial(_mha_kernel, nhead=nhead, nb=nb, L=L, S=S)

    # VMEM footprint: double-buffered activation blocks + resident weights.
    act_bytes = (nb * L * E + nb * S * E + nb * L * E) * 4
    w_bytes = (E * E + E * 2 * E + E * E + 4 * E) * 4
    vmem_limit = max(8 << 20, 8 * (2 * act_bytes + 2 * w_bytes))

    out = pl.pallas_call(
        kernel,
        out_shape=jax.ShapeDtypeStruct((N, L, E), x.dtype),
        grid=(N // nb,),
        in_specs=[
            pl.BlockSpec((nb, L, E), lambda b: (b, 0, 0)),
            pl.BlockSpec((nb, S, E), lambda b: (b, 0, 0)),
            # Weights / biases: constant index_maps -> same block every step.
            pl.BlockSpec((E, E), lambda b: (0, 0)),
            pl.BlockSpec((E, 2 * E), lambda b: (0, 0)),
            pl.BlockSpec((E, E), lambda b: (0, 0)),
            pl.BlockSpec((1, 4 * E), lambda b: (0, 0)),
        ],
        out_specs=pl.BlockSpec((nb, L, E), lambda b: (b, 0, 0)),
        compiler_params=pltpu.CompilerParams(
            dimension_semantics=("parallel",),
            vmem_limit_bytes=int(vmem_limit),
        ),
    )(xb, pb, wq_t, wkv_t, wo_t, b_all)

    return jnp.transpose(out, (1, 0, 2))              # back to (L, N, E)


def _reference(x, pos, in_proj_w, in_proj_b, out_proj_w, out_proj_b, nhead):
    """Pure-JAX replica of nn.MultiheadAttention forward (eval mode)."""
    L, N, E = x.shape
    S = pos.shape[0]
    hd = E // nhead
    wq, wk, wv = jnp.split(in_proj_w, 3, axis=0)
    bq, bk, bv = jnp.split(in_proj_b, 3, axis=0)
    q = jnp.einsum('lne,fe->lnf', x, wq) + bq
    k = jnp.einsum('sne,fe->snf', pos, wk) + bk
    v = jnp.einsum('sne,fe->snf', pos, wv) + bv
    q = q.reshape(L, N, nhead, hd) / math.sqrt(hd)
    k = k.reshape(S, N, nhead, hd)
    v = v.reshape(S, N, nhead, hd)
    s = jnp.einsum('lnhd,snhd->nhls', q, k)
    p = jax.nn.softmax(s, axis=-1)
    ctx = jnp.einsum('nhls,snhd->lnhd', p, v).reshape(L, N, E)
    return jnp.einsum('lne,fe->lnf', ctx, out_proj_w) + out_proj_b


if __name__ == "__main__":
    d_model, nhead = 32, 4
    L, S, N = 8, 8, 2

    key = jax.random.PRNGKey(0)
    k1, k2, k3, k4, k5, k6 = jax.random.split(key, 6)

    x = jax.random.normal(k1, (L, N, d_model), dtype=jnp.float32)
    pos = jax.random.normal(k2, (S, N, d_model), dtype=jnp.float32)

    # Deterministic synthetic parameters (shapes match nn.MultiheadAttention).
    in_proj_w = jax.random.normal(k3, (3 * d_model, d_model), jnp.float32) * 0.1
    in_proj_b = jax.random.normal(k4, (3 * d_model,), jnp.float32) * 0.1
    out_proj_w = jax.random.normal(k5, (d_model, d_model), jnp.float32) * 0.1
    out_proj_b = jax.random.normal(k6, (d_model,), jnp.float32) * 0.1

    out = attention_fusion(x, pos, in_proj_w, in_proj_b, out_proj_w, out_proj_b,
                           nhead=nhead)
    out = jax.block_until_ready(out)

    ref = _reference(x, pos, in_proj_w, in_proj_b, out_proj_w, out_proj_b, nhead)
    assert out.shape == (L, N, d_model)
    assert jnp.allclose(out, ref, atol=1e-4, rtol=1e-4), "mismatch vs JAX reference"

    print("KERNEL_OK")
</pallas_src>

<mosaic_0001>
module attributes {stable_mosaic.version = 11 : i64} {
  func.func @_mha_kernel(%arg0: i32, %arg1: memref<2x8x32xf32, #tpu.memory_space<vmem>>, %arg2: memref<2x8x32xf32, #tpu.memory_space<vmem>>, %arg3: memref<32x32xf32, #tpu.memory_space<vmem>>, %arg4: memref<32x64xf32, #tpu.memory_space<vmem>>, %arg5: memref<32x32xf32, #tpu.memory_space<vmem>>, %arg6: memref<1x128xf32, #tpu.memory_space<vmem>>, %arg7: memref<2x8x32xf32, #tpu.memory_space<vmem>>) attributes {dimension_semantics = [#tpu.dimension_semantics<parallel>], iteration_bounds = array<i64: 1>, scalar_prefetch = 0 : i64, scratch_operands = 0 : i64, tpu.core_type = #tpu.core_type<tc>, window_params = [{transform_indices = @transform_0, window_bounds = array<i64: 2, 8, 32>}, {transform_indices = @transform_1, window_bounds = array<i64: 2, 8, 32>}, {pipeline_mode = #tpu.pipeline_mode<synchronous>, transform_indices = @transform_2, window_bounds = array<i64: 32, 32>}, {pipeline_mode = #tpu.pipeline_mode<synchronous>, transform_indices = @transform_3, window_bounds = array<i64: 32, 64>}, {pipeline_mode = #tpu.pipeline_mode<synchronous>, transform_indices = @transform_4, window_bounds = array<i64: 32, 32>}, {pipeline_mode = #tpu.pipeline_mode<synchronous>, transform_indices = @transform_5, window_bounds = array<i64: 1, 128>}, {transform_indices = @transform_6, window_bounds = array<i64: 2, 8, 32>}]} {
    %c0 = arith.constant 0 : index
    %c0_0 = arith.constant 0 : index
    %0 = vector.load %arg6[%c0, %c0_0] : memref<1x128xf32, #tpu.memory_space<vmem>>, vector<1x128xf32>
    %1 = vector.extract_strided_slice %0 {offsets = [0, 0], sizes = [1, 32], strides = [1, 1]} : vector<1x128xf32> to vector<1x32xf32>
    %2 = vector.extract_strided_slice %0 {offsets = [0, 32], sizes = [1, 64], strides = [1, 1]} : vector<1x128xf32> to vector<1x64xf32>
    %3 = vector.extract_strided_slice %0 {offsets = [0, 96], sizes = [1, 32], strides = [1, 1]} : vector<1x128xf32> to vector<1x32xf32>
    %c0_1 = arith.constant 0 : index
    %c0_2 = arith.constant 0 : index
    %c0_3 = arith.constant 0 : index
    %4 = vector.load %arg1[%c0_1, %c0_2, %c0_3] : memref<2x8x32xf32, #tpu.memory_space<vmem>>, vector<2x8x32xf32>
    %5 = vector.shape_cast %4 : vector<2x8x32xf32> to vector<16x32xf32>
    %c0_4 = arith.constant 0 : index
    %c0_5 = arith.constant 0 : index
    %c0_6 = arith.constant 0 : index
    %6 = vector.load %arg2[%c0_4, %c0_5, %c0_6] : memref<2x8x32xf32, #tpu.memory_space<vmem>>, vector<2x8x32xf32>
    %7 = vector.shape_cast %6 : vector<2x8x32xf32> to vector<16x32xf32>
    %c0_7 = arith.constant 0 : index
    %c0_8 = arith.constant 0 : index
    %8 = vector.load %arg3[%c0_7, %c0_8] : memref<32x32xf32, #tpu.memory_space<vmem>>, vector<32x32xf32>
    %cst = arith.constant dense<0.000000e+00> : vector<16x32xf32>
    %9 = tpu.matmul %5, %8, %cst {dimension_numbers = #tpu.dot_dimension_numbers<[1], [0], [0], [1], [0, 0, 1, 1], [], []>} : vector<16x32xf32>, vector<32x32xf32>, vector<16x32xf32> -> vector<16x32xf32>
    %10 = vector.broadcast %1 : vector<1x32xf32> to vector<16x32xf32>
    %11 = arith.addf %9, %10 : vector<16x32xf32>
    %c0_9 = arith.constant 0 : index
    %c0_10 = arith.constant 0 : index
    %12 = vector.load %arg4[%c0_9, %c0_10] : memref<32x64xf32, #tpu.memory_space<vmem>>, vector<32x64xf32>
    %cst_11 = arith.constant dense<0.000000e+00> : vector<16x64xf32>
    %13 = tpu.matmul %7, %12, %cst_11 {dimension_numbers = #tpu.dot_dimension_numbers<[1], [0], [0], [1], [0, 0, 1, 1], [], []>} : vector<16x32xf32>, vector<32x64xf32>, vector<16x64xf32> -> vector<16x64xf32>
    %14 = vector.broadcast %2 : vector<1x64xf32> to vector<16x64xf32>
    %15 = arith.addf %13, %14 : vector<16x64xf32>
    %c0_12 = arith.constant 0 : index
    %c0_13 = arith.constant 0 : index
    %16 = vector.load %arg5[%c0_12, %c0_13] : memref<32x32xf32, #tpu.memory_space<vmem>>, vector<32x32xf32>
    %17 = vector.extract_strided_slice %11 {offsets = [0, 0], sizes = [8, 32], strides = [1, 1]} : vector<16x32xf32> to vector<8x32xf32>
    %18 = vector.extract_strided_slice %15 {offsets = [0, 0], sizes = [8, 64], strides = [1, 1]} : vector<16x64xf32> to vector<8x64xf32>
    %cst_14 = arith.constant 0.000000e+00 : f32
    %19 = vector.broadcast %cst_14 : f32 to vector<8x32xf32>
    %20 = vector.extract_strided_slice %17 {offsets = [0, 0], sizes = [8, 8], strides = [1, 1]} : vector<8x32xf32> to vector<8x8xf32>
    %21 = vector.extract_strided_slice %18 {offsets = [0, 0], sizes = [8, 8], strides = [1, 1]} : vector<8x64xf32> to vector<8x8xf32>
    %22 = vector.extract_strided_slice %18 {offsets = [0, 32], sizes = [8, 8], strides = [1, 1]} : vector<8x64xf32> to vector<8x8xf32>
    %cst_15 = arith.constant dense<0.000000e+00> : vector<8x8xf32>
    %23 = tpu.matmul %20, %21, %cst_15 {dimension_numbers = #tpu.dot_dimension_numbers<[1], [1], [0], [0], [0, 0, 1, 0], [], []>} : vector<8x8xf32>, vector<8x8xf32>, vector<8x8xf32> -> vector<8x8xf32>
    %cst_16 = arith.constant dense<0xFF800000> : vector<8xf32>
    %24 = vector.multi_reduction <maximumf>, %23, %cst_16 [1] : vector<8x8xf32> to vector<8xf32>
    %25 = vector.shape_cast %24 : vector<8xf32> to vector<8x1xf32>
    %26 = vector.broadcast %25 : vector<8x1xf32> to vector<8x8xf32>
    %27 = arith.subf %23, %26 : vector<8x8xf32>
    %28 = math.exp %27 : vector<8x8xf32>
    %cst_17 = arith.constant dense<0.000000e+00> : vector<8xf32>
    %29 = vector.multi_reduction <add>, %28, %cst_17 [1] : vector<8x8xf32> to vector<8xf32>
    %30 = vector.shape_cast %29 : vector<8xf32> to vector<8x1xf32>
    %cst_18 = arith.constant dense<0.000000e+00> : vector<8x8xf32>
    %31 = tpu.matmul %28, %22, %cst_18 {dimension_numbers = #tpu.dot_dimension_numbers<[1], [0], [0], [1], [0, 0, 1, 1], [], []>} : vector<8x8xf32>, vector<8x8xf32>, vector<8x8xf32> -> vector<8x8xf32>
    %32 = vector.broadcast %30 : vector<8x1xf32> to vector<8x8xf32>
    %33 = arith.divf %31, %32 : vector<8x8xf32>
    %34 = vector.extract_strided_slice %16 {offsets = [0, 0], sizes = [8, 32], strides = [1, 1]} : vector<32x32xf32> to vector<8x32xf32>
    %cst_19 = arith.constant dense<0.000000e+00> : vector<8x32xf32>
    %35 = tpu.matmul %33, %34, %cst_19 {dimension_numbers = #tpu.dot_dimension_numbers<[1], [0], [0], [1], [0, 0, 1, 1], [], []>} : vector<8x8xf32>, vector<8x32xf32>, vector<8x32xf32> -> vector<8x32xf32>
    %36 = arith.addf %19, %35 : vector<8x32xf32>
    %37 = vector.extract_strided_slice %17 {offsets = [0, 8], sizes = [8, 8], strides = [1, 1]} : vector<8x32xf32> to vector<8x8xf32>
    %38 = vector.extract_strided_slice %18 {offsets = [0, 8], sizes = [8, 8], strides = [1, 1]} : vector<8x64xf32> to vector<8x8xf32>
    %39 = vector.extract_strided_slice %18 {offsets = [0, 40], sizes = [8, 8], strides = [1, 1]} : vector<8x64xf32> to vector<8x8xf32>
    %cst_20 = arith.constant dense<0.000000e+00> : vector<8x8xf32>
    %40 = tpu.matmul %37, %38, %cst_20 {dimension_numbers = #tpu.dot_dimension_numbers<[1], [1], [0], [0], [0, 0, 1, 0], [], []>} : vector<8x8xf32>, vector<8x8xf32>, vector<8x8xf32> -> vector<8x8xf32>
    %cst_21 = arith.constant dense<0xFF800000> : vector<8xf32>
    %41 = vector.multi_reduction <maximumf>, %40, %cst_21 [1] : vector<8x8xf32> to vector<8xf32>
    %42 = vector.shape_cast %41 : vector<8xf32> to vector<8x1xf32>
    %43 = vector.broadcast %42 : vector<8x1xf32> to vector<8x8xf32>
    %44 = arith.subf %40, %43 : vector<8x8xf32>
    %45 = math.exp %44 : vector<8x8xf32>
    %cst_22 = arith.constant dense<0.000000e+00> : vector<8xf32>
    %46 = vector.multi_reduction <add>, %45, %cst_22 [1] : vector<8x8xf32> to vector<8xf32>
    %47 = vector.shape_cast %46 : vector<8xf32> to vector<8x1xf32>
    %cst_23 = arith.constant dense<0.000000e+00> : vector<8x8xf32>
    %48 = tpu.matmul %45, %39, %cst_23 {dimension_numbers = #tpu.dot_dimension_numbers<[1], [0], [0], [1], [0, 0, 1, 1], [], []>} : vector<8x8xf32>, vector<8x8xf32>, vector<8x8xf32> -> vector<8x8xf32>
    %49 = vector.broadcast %47 : vector<8x1xf32> to vector<8x8xf32>
    %50 = arith.divf %48, %49 : vector<8x8xf32>
    %51 = vector.extract_strided_slice %16 {offsets = [8, 0], sizes = [8, 32], strides = [1, 1]} : vector<32x32xf32> to vector<8x32xf32>
    %cst_24 = arith.constant dense<0.000000e+00> : vector<8x32xf32>
    %52 = tpu.matmul %50, %51, %cst_24 {dimension_numbers = #tpu.dot_dimension_numbers<[1], [0], [0], [1], [0, 0, 1, 1], [], []>} : vector<8x8xf32>, vector<8x32xf32>, vector<8x32xf32> -> vector<8x32xf32>
    %53 = arith.addf %36, %52 : vector<8x32xf32>
    %54 = vector.extract_strided_slice %17 {offsets = [0, 16], sizes = [8, 8], strides = [1, 1]} : vector<8x32xf32> to vector<8x8xf32>
    %55 = vector.extract_strided_slice %18 {offsets = [0, 16], sizes = [8, 8], strides = [1, 1]} : vector<8x64xf32> to vector<8x8xf32>
    %56 = vector.extract_strided_slice %18 {offsets = [0, 48], sizes = [8, 8], strides = [1, 1]} : vector<8x64xf32> to vector<8x8xf32>
    %cst_25 = arith.constant dense<0.000000e+00> : vector<8x8xf32>
    %57 = tpu.matmul %54, %55, %cst_25 {dimension_numbers = #tpu.dot_dimension_numbers<[1], [1], [0], [0], [0, 0, 1, 0], [], []>} : vector<8x8xf32>, vector<8x8xf32>, vector<8x8xf32> -> vector<8x8xf32>
    %cst_26 = arith.constant dense<0xFF800000> : vector<8xf32>
    %58 = vector.multi_reduction <maximumf>, %57, %cst_26 [1] : vector<8x8xf32> to vector<8xf32>
    %59 = vector.shape_cast %58 : vector<8xf32> to vector<8x1xf32>
    %60 = vector.broadcast %59 : vector<8x1xf32> to vector<8x8xf32>
    %61 = arith.subf %57, %60 : vector<8x8xf32>
    %62 = math.exp %61 : vector<8x8xf32>
    %cst_27 = arith.constant dense<0.000000e+00> : vector<8xf32>
    %63 = vector.multi_reduction <add>, %62, %cst_27 [1] : vector<8x8xf32> to vector<8xf32>
    %64 = vector.shape_cast %63 : vector<8xf32> to vector<8x1xf32>
    %cst_28 = arith.constant dense<0.000000e+00> : vector<8x8xf32>
    %65 = tpu.matmul %62, %56, %cst_28 {dimension_numbers = #tpu.dot_dimension_numbers<[1], [0], [0], [1], [0, 0, 1, 1], [], []>} : vector<8x8xf32>, vector<8x8xf32>, vector<8x8xf32> -> vector<8x8xf32>
    %66 = vector.broadcast %64 : vector<8x1xf32> to vector<8x8xf32>
    %67 = arith.divf %65, %66 : vector<8x8xf32>
    %68 = vector.extract_strided_slice %16 {offsets = [16, 0], sizes = [8, 32], strides = [1, 1]} : vector<32x32xf32> to vector<8x32xf32>
    %cst_29 = arith.constant dense<0.000000e+00> : vector<8x32xf32>
    %69 = tpu.matmul %67, %68, %cst_29 {dimension_numbers = #tpu.dot_dimension_numbers<[1], [0], [0], [1], [0, 0, 1, 1], [], []>} : vector<8x8xf32>, vector<8x32xf32>, vector<8x32xf32> -> vector<8x32xf32>
    %70 = arith.addf %53, %69 : vector<8x32xf32>
    %71 = vector.extract_strided_slice %17 {offsets = [0, 24], sizes = [8, 8], strides = [1, 1]} : vector<8x32xf32> to vector<8x8xf32>
    %72 = vector.extract_strided_slice %18 {offsets = [0, 24], sizes = [8, 8], strides = [1, 1]} : vector<8x64xf32> to vector<8x8xf32>
    %73 = vector.extract_strided_slice %18 {offsets = [0, 56], sizes = [8, 8], strides = [1, 1]} : vector<8x64xf32> to vector<8x8xf32>
    %cst_30 = arith.constant dense<0.000000e+00> : vector<8x8xf32>
    %74 = tpu.matmul %71, %72, %cst_30 {dimension_numbers = #tpu.dot_dimension_numbers<[1], [1], [0], [0], [0, 0, 1, 0], [], []>} : vector<8x8xf32>, vector<8x8xf32>, vector<8x8xf32> -> vector<8x8xf32>
    %cst_31 = arith.constant dense<0xFF800000> : vector<8xf32>
    %75 = vector.multi_reduction <maximumf>, %74, %cst_31 [1] : vector<8x8xf32> to vector<8xf32>
    %76 = vector.shape_cast %75 : vector<8xf32> to vector<8x1xf32>
    %77 = vector.broadcast %76 : vector<8x1xf32> to vector<8x8xf32>
    %78 = arith.subf %74, %77 : vector<8x8xf32>
    %79 = math.exp %78 : vector<8x8xf32>
    %cst_32 = arith.constant dense<0.000000e+00> : vector<8xf32>
    %80 = vector.multi_reduction <add>, %79, %cst_32 [1] : vector<8x8xf32> to vector<8xf32>
    %81 = vector.shape_cast %80 : vector<8xf32> to vector<8x1xf32>
    %cst_33 = arith.constant dense<0.000000e+00> : vector<8x8xf32>
    %82 = tpu.matmul %79, %73, %cst_33 {dimension_numbers = #tpu.dot_dimension_numbers<[1], [0], [0], [1], [0, 0, 1, 1], [], []>} : vector<8x8xf32>, vector<8x8xf32>, vector<8x8xf32> -> vector<8x8xf32>
    %83 = vector.broadcast %81 : vector<8x1xf32> to vector<8x8xf32>
    %84 = arith.divf %82, %83 : vector<8x8xf32>
    %85 = vector.extract_strided_slice %16 {offsets = [24, 0], sizes = [8, 32], strides = [1, 1]} : vector<32x32xf32> to vector<8x32xf32>
    %cst_34 = arith.constant dense<0.000000e+00> : vector<8x32xf32>
    %86 = tpu.matmul %84, %85, %cst_34 {dimension_numbers = #tpu.dot_dimension_numbers<[1], [0], [0], [1], [0, 0, 1, 1], [], []>} : vector<8x8xf32>, vector<8x32xf32>, vector<8x32xf32> -> vector<8x32xf32>
    %87 = arith.addf %70, %86 : vector<8x32xf32>
    %88 = vector.broadcast %3 : vector<1x32xf32> to vector<8x32xf32>
    %89 = arith.addf %87, %88 : vector<8x32xf32>
    %c0_35 = arith.constant 0 : index
    %c0_36 = arith.constant 0 : index
    %c0_37 = arith.constant 0 : index
    %90 = vector.load %arg7[%c0_35, %c0_36, %c0_37] : memref<2x8x32xf32, #tpu.memory_space<vmem>>, vector<1x8x32xf32>
    %91 = vector.shape_cast %90 : vector<1x8x32xf32> to vector<8x32xf32>
    %92 = vector.shape_cast %89 : vector<8x32xf32> to vector<1x8x32xf32>
    tpu.vector_store %arg7[%c0_35, %c0_36, %c0_37], %92 {strides = array<i32>} : memref<2x8x32xf32, #tpu.memory_space<vmem>>, vector<1x8x32xf32>,
    %93 = vector.extract_strided_slice %11 {offsets = [8, 0], sizes = [8, 32], strides = [1, 1]} : vector<16x32xf32> to vector<8x32xf32>
    %94 = vector.extract_strided_slice %15 {offsets = [8, 0], sizes = [8, 64], strides = [1, 1]} : vector<16x64xf32> to vector<8x64xf32>
    %cst_38 = arith.constant 0.000000e+00 : f32
    %95 = vector.broadcast %cst_38 : f32 to vector<8x32xf32>
    %96 = vector.extract_strided_slice %93 {offsets = [0, 0], sizes = [8, 8], strides = [1, 1]} : vector<8x32xf32> to vector<8x8xf32>
    %97 = vector.extract_strided_slice %94 {offsets = [0, 0], sizes = [8, 8], strides = [1, 1]} : vector<8x64xf32> to vector<8x8xf32>
    %98 = vector.extract_strided_slice %94 {offsets = [0, 32], sizes = [8, 8], strides = [1, 1]} : vector<8x64xf32> to vector<8x8xf32>
    %cst_39 = arith.constant dense<0.000000e+00> : vector<8x8xf32>
    %99 = tpu.matmul %96, %97, %cst_39 {dimension_numbers = #tpu.dot_dimension_numbers<[1], [1], [0], [0], [0, 0, 1, 0], [], []>} : vector<8x8xf32>, vector<8x8xf32>, vector<8x8xf32> -> vector<8x8xf32>
    %cst_40 = arith.constant dense<0xFF800000> : vector<8xf32>
    %100 = vector.multi_reduction <maximumf>, %99, %cst_40 [1] : vector<8x8xf32> to vector<8xf32>
    %101 = vector.shape_cast %100 : vector<8xf32> to vector<8x1xf32>
    %102 = vector.broadcast %101 : vector<8x1xf32> to vector<8x8xf32>
    %103 = arith.subf %99, %102 : vector<8x8xf32>
    %104 = math.exp %103 : vector<8x8xf32>
    %cst_41 = arith.constant dense<0.000000e+00> : vector<8xf32>
    %105 = vector.multi_reduction <add>, %104, %cst_41 [1] : vector<8x8xf32> to vector<8xf32>
    %106 = vector.shape_cast %105 : vector<8xf32> to vector<8x1xf32>
    %cst_42 = arith.constant dense<0.000000e+00> : vector<8x8xf32>
    %107 = tpu.matmul %104, %98, %cst_42 {dimension_numbers = #tpu.dot_dimension_numbers<[1], [0], [0], [1], [0, 0, 1, 1], [], []>} : vector<8x8xf32>, vector<8x8xf32>, vector<8x8xf32> -> vector<8x8xf32>
    %108 = vector.broadcast %106 : vector<8x1xf32> to vector<8x8xf32>
    %109 = arith.divf %107, %108 : vector<8x8xf32>
    %110 = vector.extract_strided_slice %16 {offsets = [0, 0], sizes = [8, 32], strides = [1, 1]} : vector<32x32xf32> to vector<8x32xf32>
    %cst_43 = arith.constant dense<0.000000e+00> : vector<8x32xf32>
    %111 = tpu.matmul %109, %110, %cst_43 {dimension_numbers = #tpu.dot_dimension_numbers<[1], [0], [0], [1], [0, 0, 1, 1], [], []>} : vector<8x8xf32>, vector<8x32xf32>, vector<8x32xf32> -> vector<8x32xf32>
    %112 = arith.addf %95, %111 : vector<8x32xf32>
    %113 = vector.extract_strided_slice %93 {offsets = [0, 8], sizes = [8, 8], strides = [1, 1]} : vector<8x32xf32> to vector<8x8xf32>
    %114 = vector.extract_strided_slice %94 {offsets = [0, 8], sizes = [8, 8], strides = [1, 1]} : vector<8x64xf32> to vector<8x8xf32>
    %115 = vector.extract_strided_slice %94 {offsets = [0, 40], sizes = [8, 8], strides = [1, 1]} : vector<8x64xf32> to vector<8x8xf32>
    %cst_44 = arith.constant dense<0.000000e+00> : vector<8x8xf32>
    %116 = tpu.matmul %113, %114, %cst_44 {dimension_numbers = #tpu.dot_dimension_numbers<[1], [1], [0], [0], [0, 0, 1, 0], [], []>} : vector<8x8xf32>, vector<8x8xf32>, vector<8x8xf32> -> vector<8x8xf32>
    %cst_45 = arith.constant dense<0xFF800000> : vector<8xf32>
    %117 = vector.multi_reduction <maximumf>, %116, %cst_45 [1] : vector<8x8xf32> to vector<8xf32>
    %118 = vector.shape_cast %117 : vector<8xf32> to vector<8x1xf32>
    %119 = vector.broadcast %118 : vector<8x1xf32> to vector<8x8xf32>
    %120 = arith.subf %116, %119 : vector<8x8xf32>
    %121 = math.exp %120 : vector<8x8xf32>
    %cst_46 = arith.constant dense<0.000000e+00> : vector<8xf32>
    %122 = vector.multi_reduction <add>, %121, %cst_46 [1] : vector<8x8xf32> to vector<8xf32>
    %123 = vector.shape_cast %122 : vector<8xf32> to vector<8x1xf32>
    %cst_47 = arith.constant dense<0.000000e+00> : vector<8x8xf32>
    %124 = tpu.matmul %121, %115, %cst_47 {dimension_numbers = #tpu.dot_dimension_numbers<[1], [0], [0], [1], [0, 0, 1, 1], [], []>} : vector<8x8xf32>, vector<8x8xf32>, vector<8x8xf32> -> vector<8x8xf32>
    %125 = vector.broadcast %123 : vector<8x1xf32> to vector<8x8xf32>
    %126 = arith.divf %124, %125 : vector<8x8xf32>
    %127 = vector.extract_strided_slice %16 {offsets = [8, 0], sizes = [8, 32], strides = [1, 1]} : vector<32x32xf32> to vector<8x32xf32>
    %cst_48 = arith.constant dense<0.000000e+00> : vector<8x32xf32>
    %128 = tpu.matmul %126, %127, %cst_48 {dimension_numbers = #tpu.dot_dimension_numbers<[1], [0], [0], [1], [0, 0, 1, 1], [], []>} : vector<8x8xf32>, vector<8x32xf32>, vector<8x32xf32> -> vector<8x32xf32>
    %129 = arith.addf %112, %128 : vector<8x32xf32>
    %130 = vector.extract_strided_slice %93 {offsets = [0, 16], sizes = [8, 8], strides = [1, 1]} : vector<8x32xf32> to vector<8x8xf32>
    %131 = vector.extract_strided_slice %94 {offsets = [0, 16], sizes = [8, 8], strides = [1, 1]} : vector<8x64xf32> to vector<8x8xf32>
    %132 = vector.extract_strided_slice %94 {offsets = [0, 48], sizes = [8, 8], strides = [1, 1]} : vector<8x64xf32> to vector<8x8xf32>
    %cst_49 = arith.constant dense<0.000000e+00> : vector<8x8xf32>
    %133 = tpu.matmul %130, %131, %cst_49 {dimension_numbers = #tpu.dot_dimension_numbers<[1], [1], [0], [0], [0, 0, 1, 0], [], []>} : vector<8x8xf32>, vector<8x8xf32>, vector<8x8xf32> -> vector<8x8xf32>
    %cst_50 = arith.constant dense<0xFF800000> : vector<8xf32>
    %134 = vector.multi_reduction <maximumf>, %133, %cst_50 [1] : vector<8x8xf32> to vector<8xf32>
    %135 = vector.shape_cast %134 : vector<8xf32> to vector<8x1xf32>
    %136 = vector.broadcast %135 : vector<8x1xf32> to vector<8x8xf32>
    %137 = arith.subf %133, %136 : vector<8x8xf32>
    %138 = math.exp %137 : vector<8x8xf32>
    %cst_51 = arith.constant dense<0.000000e+00> : vector<8xf32>
    %139 = vector.multi_reduction <add>, %138, %cst_51 [1] : vector<8x8xf32> to vector<8xf32>
    %140 = vector.shape_cast %139 : vector<8xf32> to vector<8x1xf32>
    %cst_52 = arith.constant dense<0.000000e+00> : vector<8x8xf32>
    %141 = tpu.matmul %138, %132, %cst_52 {dimension_numbers = #tpu.dot_dimension_numbers<[1], [0], [0], [1], [0, 0, 1, 1], [], []>} : vector<8x8xf32>, vector<8x8xf32>, vector<8x8xf32> -> vector<8x8xf32>
    %142 = vector.broadcast %140 : vector<8x1xf32> to vector<8x8xf32>
    %143 = arith.divf %141, %142 : vector<8x8xf32>
    %144 = vector.extract_strided_slice %16 {offsets = [16, 0], sizes = [8, 32], strides = [1, 1]} : vector<32x32xf32> to vector<8x32xf32>
    %cst_53 = arith.constant dense<0.000000e+00> : vector<8x32xf32>
    %145 = tpu.matmul %143, %144, %cst_53 {dimension_numbers = #tpu.dot_dimension_numbers<[1], [0], [0], [1], [0, 0, 1, 1], [], []>} : vector<8x8xf32>, vector<8x32xf32>, vector<8x32xf32> -> vector<8x32xf32>
    %146 = arith.addf %129, %145 : vector<8x32xf32>
    %147 = vector.extract_strided_slice %93 {offsets = [0, 24], sizes = [8, 8], strides = [1, 1]} : vector<8x32xf32> to vector<8x8xf32>
    %148 = vector.extract_strided_slice %94 {offsets = [0, 24], sizes = [8, 8], strides = [1, 1]} : vector<8x64xf32> to vector<8x8xf32>
    %149 = vector.extract_strided_slice %94 {offsets = [0, 56], sizes = [8, 8], strides = [1, 1]} : vector<8x64xf32> to vector<8x8xf32>
    %cst_54 = arith.constant dense<0.000000e+00> : vector<8x8xf32>
    %150 = tpu.matmul %147, %148, %cst_54 {dimension_numbers = #tpu.dot_dimension_numbers<[1], [1], [0], [0], [0, 0, 1, 0], [], []>} : vector<8x8xf32>, vector<8x8xf32>, vector<8x8xf32> -> vector<8x8xf32>
    %cst_55 = arith.constant dense<0xFF800000> : vector<8xf32>
    %151 = vector.multi_reduction <maximumf>, %150, %cst_55 [1] : vector<8x8xf32> to vector<8xf32>
    %152 = vector.shape_cast %151 : vector<8xf32> to vector<8x1xf32>
    %153 = vector.broadcast %152 : vector<8x1xf32> to vector<8x8xf32>
    %154 = arith.subf %150, %153 : vector<8x8xf32>
    %155 = math.exp %154 : vector<8x8xf32>
    %cst_56 = arith.constant dense<0.000000e+00> : vector<8xf32>
    %156 = vector.multi_reduction <add>, %155, %cst_56 [1] : vector<8x8xf32> to vector<8xf32>
    %157 = vector.shape_cast %156 : vector<8xf32> to vector<8x1xf32>
    %cst_57 = arith.constant dense<0.000000e+00> : vector<8x8xf32>
    %158 = tpu.matmul %155, %149, %cst_57 {dimension_numbers = #tpu.dot_dimension_numbers<[1], [0], [0], [1], [0, 0, 1, 1], [], []>} : vector<8x8xf32>, vector<8x8xf32>, vector<8x8xf32> -> vector<8x8xf32>
    %159 = vector.broadcast %157 : vector<8x1xf32> to vector<8x8xf32>
    %160 = arith.divf %158, %159 : vector<8x8xf32>
    %161 = vector.extract_strided_slice %16 {offsets = [24, 0], sizes = [8, 32], strides = [1, 1]} : vector<32x32xf32> to vector<8x32xf32>
    %cst_58 = arith.constant dense<0.000000e+00> : vector<8x32xf32>
    %162 = tpu.matmul %160, %161, %cst_58 {dimension_numbers = #tpu.dot_dimension_numbers<[1], [0], [0], [1], [0, 0, 1, 1], [], []>} : vector<8x8xf32>, vector<8x32xf32>, vector<8x32xf32> -> vector<8x32xf32>
    %163 = arith.addf %146, %162 : vector<8x32xf32>
    %164 = vector.broadcast %3 : vector<1x32xf32> to vector<8x32xf32>
    %165 = arith.addf %163, %164 : vector<8x32xf32>
    %c1 = arith.constant 1 : index
    %c0_59 = arith.constant 0 : index
    %c0_60 = arith.constant 0 : index
    %166 = vector.load %arg7[%c1, %c0_59, %c0_60] : memref<2x8x32xf32, #tpu.memory_space<vmem>>, vector<1x8x32xf32>
    %167 = vector.shape_cast %166 : vector<1x8x32xf32> to vector<8x32xf32>
    %168 = vector.shape_cast %165 : vector<8x32xf32> to vector<1x8x32xf32>
    tpu.vector_store %arg7[%c1, %c0_59, %c0_60], %168 {strides = array<i32>} : memref<2x8x32xf32, #tpu.memory_space<vmem>>, vector<1x8x32xf32>,
    return
  }
  func.func @transform_0(%arg0: i32) -> (i32, i32, i32) {
    %c0_i32 = arith.constant 0 : i32
    %c0_i32_0 = arith.constant 0 : i32
    %c0_i32_1 = arith.constant 0 : i32
    return %arg0, %c0_i32, %c0_i32_0 : i32, i32, i32
  }
  func.func @transform_1(%arg0: i32) -> (i32, i32, i32) {
    %c0_i32 = arith.constant 0 : i32
    %c0_i32_0 = arith.constant 0 : i32
    %c0_i32_1 = arith.constant 0 : i32
    return %arg0, %c0_i32, %c0_i32_0 : i32, i32, i32
  }
  func.func @transform_2(%arg0: i32) -> (i32, i32) {
    %c0_i32 = arith.constant 0 : i32
    %c0_i32_0 = arith.constant 0 : i32
    %c0_i32_1 = arith.constant 0 : i32
    return %c0_i32, %c0_i32_0 : i32, i32
  }
  func.func @transform_3(%arg0: i32) -> (i32, i32) {
    %c0_i32 = arith.constant 0 : i32
    %c0_i32_0 = arith.constant 0 : i32
    %c0_i32_1 = arith.constant 0 : i32
    return %c0_i32, %c0_i32_0 : i32, i32
  }
  func.func @transform_4(%arg0: i32) -> (i32, i32) {
    %c0_i32 = arith.constant 0 : i32
    %c0_i32_0 = arith.constant 0 : i32
    %c0_i32_1 = arith.constant 0 : i32
    return %c0_i32, %c0_i32_0 : i32, i32
  }
  func.func @transform_5(%arg0: i32) -> (i32, i32) {
    %c0_i32 = arith.constant 0 : i32
    %c0_i32_0 = arith.constant 0 : i32
    %c0_i32_1 = arith.constant 0 : i32
    return %c0_i32, %c0_i32_0 : i32, i32
  }
  func.func @transform_6(%arg0: i32) -> (i32, i32, i32) {
    %c0_i32 = arith.constant 0 : i32
    %c0_i32_0 = arith.constant 0 : i32
    %c0_i32_1 = arith.constant 0 : i32
    return %arg0, %c0_i32, %c0_i32_0 : i32, i32, i32
  }
}

</mosaic_0001>

<llo_original>
// kernel: tpu_custom_call.1
$region0: #{tpu_custom_call.1}
  #allocation0 [shape = 'u32[]', space=smem, size = 0x4, offset = 0x4, fixed_abs, tag = 'smem constant byte address 0x4 - core index']
  #allocation1 [shape = 'u32[72,128]{1,0:T(1,128)}', space=vmem, size = 0x9000, scoped, tag = 'internal scratch']
  %s0 = inlined_call_operand.hbm [shape: f32[2,8,32], index: 0, kind: input, shape index: {}]
  %s1 = inlined_call_operand.hbm [shape: f32[2,8,32], index: 1, kind: input, shape index: {}]
  %s2 = inlined_call_operand.hbm [shape: f32[32,32], index: 2, kind: input, shape index: {}]
  %s3 = inlined_call_operand.hbm [shape: f32[32,64], index: 3, kind: input, shape index: {}]
  %s4 = inlined_call_operand.hbm [shape: f32[32,32], index: 4, kind: input, shape index: {}]
  %s5 = inlined_call_operand.vmem [shape: f32[1,128], index: 5, kind: input, shape index: {}]
  %s6 = inlined_call_operand.hbm [shape: f32[2,8,32], index: 6, kind: output, shape index: {}]
  %s7 = sld [smem:[#allocation0]]
  $region54: #{tpu_custom_call.1} parent=0
    _
  %s9 = ssub.s32 1, %s7
  %s10 = scalar_select 0, %s9, %s7
  $region1: #{tpu_custom_call.1} parent=0
    #allocation2 [shape = 'u8[8192]{0}', space=vmem, size = 0x2000, scoped, tag = 'input window, operand 0, single buffered']
    #allocation3 [shape = 's32[1]{0}', space=sflag, size = 0x4, scoped, tag = 'scoped memory for tpu_custom_call.1']
    #allocation4 [shape = 's32[1]{0}', space=sflag, size = 0x4, scoped, tag = 'scoped memory for tpu_custom_call.1']
    #allocation5 [shape = 'u8[8192]{0}', space=vmem, size = 0x2000, scoped, tag = 'input window, operand 1, single buffered']
    #allocation6 [shape = 's32[1]{0}', space=sflag, size = 0x4, scoped, tag = 'scoped memory for tpu_custom_call.1']
    #allocation7 [shape = 'u8[16384]{0}', space=vmem, size = 0x4000, scoped, tag = 'input window, operand 2, single buffered']
    #allocation8 [shape = 'u8[16384]{0}', space=vmem, size = 0x4000, scoped, tag = 'input window, operand 3, single buffered']
    #allocation9 [shape = 's32[1]{0}', space=sflag, size = 0x4, scoped, tag = 'scoped memory for tpu_custom_call.1']
    #allocation10 [shape = 'u8[16384]{0}', space=vmem, size = 0x4000, scoped, tag = 'input window, operand 4, single buffered']
    #allocation11 [shape = 'u8[8192]{0}', space=vmem, size = 0x2000, scoped, tag = 'output window, operand 0, single buffered']
    %11 = vsyncpa [#allocation3], 0
    %12 = vsyncpa [#allocation6], 0
    %13 = vsyncpa [#allocation9], 0
    %14 = vsyncpa [#allocation4], 0
    // Predicated region
    $region2: #{tpu_custom_call.1} parent=1 // pred_check
      _
    $region3: #{tpu_custom_call.1} parent=1 // pred_check_branch
      %16 = sbr.rel (0) target = $region5
    $region4: #{tpu_custom_call.1} parent=1 // pred_region
      %18 = vsyncadd [#allocation3], 0
      %s19 = sshll.u32 %s0, 4
      %s20 = int_to_ptr.hbm [resolvable:$true] %s19
      %s21 = sshll.u32 [#allocation2], 4
      %s22 = int_to_ptr.vmem [resolvable:$true] %s21
      %27 = dma.hbm_to_vmem [thread:$0]  %s20, 256, %s22, [#allocation3], 128, 128, 8
    $region5: #{tpu_custom_call.1} parent=1 // pred_fallthru
      _
    // Predicated region
    $region6: #{tpu_custom_call.1} parent=1 // pred_check
      _
    $region7: #{tpu_custom_call.1} parent=1 // pred_check_branch
      %29 = sbr.rel (0) target = $region9
    $region8: #{tpu_custom_call.1} parent=1 // pred_region
      %31 = vsyncadd [#allocation6], 0
      %s32 = sshll.u32 %s1, 4
      %s33 = int_to_ptr.hbm [resolvable:$true] %s32
      %s34 = sshll.u32 [#allocation5], 4
      %s35 = int_to_ptr.vmem [resolvable:$true] %s34
      %40 = dma.hbm_to_vmem [thread:$0]  %s33, 256, %s35, [#allocation6], 128, 128, 8
    $region9: #{tpu_custom_call.1} parent=1 // pred_fallthru
      _
    // Predicated region
    $region10: #{tpu_custom_call.1} parent=1 // pred_check
      _
    $region11: #{tpu_custom_call.1} parent=1 // pred_check_branch
      %42 = sbr.rel (0) target = $region13
    $region12: #{tpu_custom_call.1} parent=1 // pred_region
      %44 = vsyncadd [#allocation6], 0
      %s45 = sshll.u32 %s2, 4
      %s46 = int_to_ptr.hbm [resolvable:$true] %s45
      %s47 = sshll.u32 [#allocation7], 4
      %s48 = int_to_ptr.vmem [resolvable:$true] %s47
      %53 = dma.hbm_to_vmem [thread:$0]  %s46, 512, %s48, [#allocation6], 128, 128, 8
    $region13: #{tpu_custom_call.1} parent=1 // pred_fallthru
      _
    // Predicated region
    $region14: #{tpu_custom_call.1} parent=1 // pred_check
      _
    $region15: #{tpu_custom_call.1} parent=1 // pred_check_branch
      %55 = sbr.rel (0) target = $region17
    $region16: #{tpu_custom_call.1} parent=1 // pred_region
      %57 = vsyncadd [#allocation9], 0
      %s58 = sshll.u32 %s3, 4
      %s59 = int_to_ptr.hbm [resolvable:$true] %s58
      %s60 = sshll.u32 [#allocation8], 4
      %s61 = int_to_ptr.vmem [resolvable:$true] %s60
      %66 = dma.hbm_to_vmem [thread:$0]  %s59, 512, %s61, [#allocation9], 128, 128, 8
    $region17: #{tpu_custom_call.1} parent=1 // pred_fallthru
      _
    // Predicated region
    $region18: #{tpu_custom_call.1} parent=1 // pred_check
      _
    $region19: #{tpu_custom_call.1} parent=1 // pred_check_branch
      %68 = sbr.rel (0) target = $region21
    $region20: #{tpu_custom_call.1} parent=1 // pred_region
      %70 = vsyncadd [#allocation9], 0
      %s71 = sshll.u32 %s4, 4
      %s72 = int_to_ptr.hbm [resolvable:$true] %s71
      %s73 = sshll.u32 [#allocation10], 4
      %s74 = int_to_ptr.vmem [resolvable:$true] %s73
      %79 = dma.hbm_to_vmem [thread:$0]  %s72, 512, %s74, [#allocation9], 128, 128, 8
    $region21: #{tpu_custom_call.1} parent=1 // pred_fallthru
      _
    // Predicated region
    $region22: #{tpu_custom_call.1} parent=1 // pred_check
      _
    $region23: #{tpu_custom_call.1} parent=1 // pred_check_branch
      %81 = sbr.rel (0) target = $region25
    $region24: #{tpu_custom_call.1} parent=1 // pred_region
      _
    $region25: #{tpu_custom_call.1} parent=1 // pred_fallthru
      _
    // Predicated region
    $region26: #{tpu_custom_call.1} parent=1 // pred_check
      _
    $region27: #{tpu_custom_call.1} parent=1 // pred_check_branch
      %83 = sbr.rel (0) target = $region29
    $region28: #{tpu_custom_call.1} parent=1 // pred_region
      %85 = dma.done [#allocation3], 256
    $region29: #{tpu_custom_call.1} parent=1 // pred_fallthru
      _
    // Predicated region
    $region30: #{tpu_custom_call.1} parent=1 // pred_check
      _
    $region31: #{tpu_custom_call.1} parent=1 // pred_check_branch
      %87 = sbr.rel (0) target = $region33
    $region32: #{tpu_custom_call.1} parent=1 // pred_region
      %89 = dma.done [#allocation6], 256
    $region33: #{tpu_custom_call.1} parent=1 // pred_fallthru
      _
    // Predicated region
    $region34: #{tpu_custom_call.1} parent=1 // pred_check
      _
    $region35: #{tpu_custom_call.1} parent=1 // pred_check_branch
      %91 = sbr.rel (0) target = $region37
    $region36: #{tpu_custom_call.1} parent=1 // pred_region
      %93 = dma.done [#allocation6], 512
    $region37: #{tpu_custom_call.1} parent=1 // pred_fallthru
      _
    // Predicated region
    $region38: #{tpu_custom_call.1} parent=1 // pred_check
      _
    $region39: #{tpu_custom_call.1} parent=1 // pred_check_branch
      %95 = sbr.rel (0) target = $region41
    $region40: #{tpu_custom_call.1} parent=1 // pred_region
      %97 = dma.done [#allocation9], 512
    $region41: #{tpu_custom_call.1} parent=1 // pred_fallthru
      _
    // Predicated region
    $region42: #{tpu_custom_call.1} parent=1 // pred_check
      _
    $region43: #{tpu_custom_call.1} parent=1 // pred_check_branch
      %99 = sbr.rel (0) target = $region45
    $region44: #{tpu_custom_call.1} parent=1 // pred_region
      %101 = dma.done [#allocation9], 512
    $region45: #{tpu_custom_call.1} parent=1 // pred_fallthru
      _
    %v102 = vld [vmem:[%s5] sm:$0x1]
    %v103 = vld [vmem:[#allocation2] sm:$0xff]
    %v104 = vld [vmem:[#allocation2 + $0x8] sm:$0xff]
    %v105 = vld [vmem:[#allocation5] sm:$0xff]
    %v106 = vld [vmem:[#allocation5 + $0x8] sm:$0xff]
    %v107 = vld [vmem:[#allocation7] sm:$0xff]
    %v108 = vld [vmem:[#allocation7 + $0x8] sm:$0xff]
    %v109 = vld [vmem:[#allocation7 + $0x10] sm:$0xff]
    %v110 = vld [vmem:[#allocation7 + $0x18] sm:$0xff]
    %v112 = vperm.slane %v102, 0
    %vm114 = vcmask 261120
    %v116 = vsel %vm114, %v103, 0
    %v119 = vsel %vm114, %v104, 0
    %121 = vmatpush.msra.mxu0 0.0
    %122 = vmatpush.msra.mxu0 0.0
    %123 = vmatpush.msra.mxu0 0.0
    %124 = vmatpush.msra.mxu0 0.0
    %125 = vmatpush.msra.mxu0 0.0
    %126 = vmatpush.msra.mxu0 0.0
    %127 = vmatpush.msra.mxu0 0.0
    %128 = vmatpush.msra.mxu0 0.0
    %129 = vmatpush.msra.mxu0 0.0
    %130 = vmatpush.msra.mxu0 0.0
    %131 = vmatpush.msra.mxu0 0.0
    %132 = vmatpush.msra.mxu0 0.0
    %133 = vmatpush.msra.mxu0 %v110
    %134 = vmatpush.msra.mxu0 %v109
    %135 = vmatpush.msra.mxu0 %v108
    %136 = vmatpush.msra.mxu0 %v107
    %137 = vmatmul.f32.gmra.mxu0 %v116
    %v138 = vpop.f32.mrf.mxu0
    %v139 = vadd.f32 %v112, %v138
    %140 = vmatmul.f32.gmra.mxu0 %v119
    %v141 = vpop.f32.mrf.mxu0
    %v142 = vadd.f32 %v112, %v141
    %143 = vdwg.mxu0
    %v144 = vld [vmem:[#allocation8] sm:$0xff]
    %v145 = vld [vmem:[#allocation8 + $0x8] sm:$0xff]
    %v146 = vld [vmem:[#allocation8 + $0x10] sm:$0xff]
    %v147 = vld [vmem:[#allocation8 + $0x18] sm:$0xff]
    %148 = vrot.lane.b32.xlu0 %v112, 96
    %v149 = vpop.permute.xlu0 %148
    %v152 = vsel %vm114, %v105, 0
    %v155 = vsel %vm114, %v106, 0
    %157 = vmatpush.msra.mxu0 0.0
    %158 = vmatpush.msra.mxu0 0.0
    %159 = vmatpush.msra.mxu0 0.0
    %160 = vmatpush.msra.mxu0 0.0
    %161 = vmatpush.msra.mxu0 0.0
    %162 = vmatpush.msra.mxu0 0.0
    %163 = vmatpush.msra.mxu0 0.0
    %164 = vmatpush.msra.mxu0 0.0
    %165 = vmatpush.msra.mxu0 0.0
    %166 = vmatpush.msra.mxu0 0.0
    %167 = vmatpush.msra.mxu0 0.0
    %168 = vmatpush.msra.mxu0 0.0
    %169 = vmatpush.msra.mxu0 %v147
    %170 = vmatpush.msra.mxu0 %v146
    %171 = vmatpush.msra.mxu0 %v145
    %172 = vmatpush.msra.mxu0 %v144
    %173 = vmatmul.f32.gmra.mxu0 %v152
    %v174 = vpop.f32.mrf.mxu0
    %v175 = vadd.f32 %v149, %v174
    %176 = vmatmul.f32.gmra.mxu0 %v155
    %v177 = vpop.f32.mrf.mxu0
    %v178 = vadd.f32 %v149, %v177
    %179 = vdwg.mxu0
    %v180 = vld [vmem:[#allocation10] sm:$0xff]
    %v181 = vld [vmem:[#allocation10 + $0x8] sm:$0xff]
    %v182 = vld [vmem:[#allocation10 + $0x10] sm:$0xff]
    %v183 = vld [vmem:[#allocation10 + $0x18] sm:$0xff]
    %vm184 = vcmask 64512
    %v186 = vsel %vm184, %v139, 0
    %v189 = vsel %vm184, %v175, 0
    %191 = vmatpush.xpose.msra.mxu0 0.0
    %192 = vmatpush.xpose.msra.mxu0 0.0
    %193 = vmatpush.xpose.msra.mxu0 0.0
    %194 = vmatpush.xpose.msra.mxu0 0.0
    %195 = vmatpush.xpose.msra.mxu0 0.0
    %196 = vmatpush.xpose.msra.mxu0 0.0
    %197 = vmatpush.xpose.msra.mxu0 0.0
    %198 = vmatpush.xpose.msra.mxu0 0.0
    %199 = vmatpush.xpose.msra.mxu0 0.0
    %200 = vmatpush.xpose.msra.mxu0 0.0
    %201 = vmatpush.xpose.msra.mxu0 0.0
    %202 = vmatpush.xpose.msra.mxu0 0.0
    %203 = vmatpush.xpose.msra.mxu0 0.0
    %204 = vmatpush.xpose.msra.mxu0 0.0
    %205 = vmatpush.xpose.msra.mxu0 0.0
    %206 = vmatpush.xpose.msra.mxu0 %v189
    %207 = vmatmul.f32.gmra.mxu0 %v186
    %v208 = vpop.f32.mrf.mxu0
    %v209 = vadd.f32 0.0, %v208
    %210 = vdwg.mxu0
    %v211 = vsel %vm184, %v209, -inf
    %212 = vmax.xlane.f32.xlu0 %v211
    %v213 = vpop.xlane.xlu0 %212
    %v214 = vsub.f32 %v209, %v213
    %v215 = vmul.f32 %v214, 1.442695
    %v216 = vpow.pop %v215
    %v217 = vsel %vm184, %v216, 0.0
    %218 = vadd.xlane.f32.xlu0 %v217
    %v219 = vpop.xlane.xlu0 %218
    %220 = vrot.lane.b32.xlu0 %v175, 96
    %v221 = vpop.permute.xlu0 %220
    %v224 = vsel %vm184, %v216, 0
    %226 = vmatpush.msra.mxu0 0.0
    %227 = vmatpush.msra.mxu0 0.0
    %228 = vmatpush.msra.mxu0 0.0
    %229 = vmatpush.msra.mxu0 0.0
    %230 = vmatpush.msra.mxu0 0.0
    %231 = vmatpush.msra.mxu0 0.0
    %232 = vmatpush.msra.mxu0 0.0
    %233 = vmatpush.msra.mxu0 0.0
    %234 = vmatpush.msra.mxu0 0.0
    %235 = vmatpush.msra.mxu0 0.0
    %236 = vmatpush.msra.mxu0 0.0
    %237 = vmatpush.msra.mxu0 0.0
    %238 = vmatpush.msra.mxu0 0.0
    %239 = vmatpush.msra.mxu0 0.0
    %240 = vmatpush.msra.mxu0 0.0
    %241 = vmatpush.msra.mxu0 %v221
    %242 = vmatmul.f32.gmra.mxu0 %v224
    %v243 = vpop.f32.mrf.mxu0
    %v244 = vadd.f32 0.0, %v243
    %245 = vdwg.mxu0
    %v246 = vrcp.pop %v219
    %v247 = vmul.f32 %v219, %v246
    %v248 = vsub.f32 1.0, %v247
    %v249 = vmul.f32 %v246, %v248
    %v250 = vadd.f32 %v246, %v249
    %vm251 = vweird.f32 %v219
    %vm252 = vweird.f32 %v246
    %vm253 = vmor %vm251, %vm252
    %v254 = vsel %vm253, %v246, %v250
    %v255 = vand.u32 2147483647, %v219
    %vm256 = vcmp.eq.f32.partialorder %v255, 8.507059e+37
    %v257 = vand.u32 %v219, 2147483648
    %v258 = vor.u32 1.1754944e-38, %v257
    %v259 = vsel %vm256, %v258, %v254
    %v260 = vmul.f32 %v244, %v259
    %261 = vrot.lane.b32.xlu0 %v139, 120
    %v262 = vpop.permute.xlu0 %261
    %263 = vrot.lane.b32.xlu0 %v175, 120
    %v264 = vpop.permute.xlu0 %263
    %v265 = vsel %vm184, %v262, 0
    %v267 = vsel %vm184, %v264, 0
    %269 = vmatpush.xpose.msra.mxu0 0.0
    %270 = vmatpush.xpose.msra.mxu0 0.0
    %271 = vmatpush.xpose.msra.mxu0 0.0
    %272 = vmatpush.xpose.msra.mxu0 0.0
    %273 = vmatpush.xpose.msra.mxu0 0.0
    %274 = vmatpush.xpose.msra.mxu0 0.0
    %275 = vmatpush.xpose.msra.mxu0 0.0
    %276 = vmatpush.xpose.msra.mxu0 0.0
    %277 = vmatpush.xpose.msra.mxu0 0.0
    %278 = vmatpush.xpose.msra.mxu0 0.0
    %279 = vmatpush.xpose.msra.mxu0 0.0
    %280 = vmatpush.xpose.msra.mxu0 0.0
    %281 = vmatpush.xpose.msra.mxu0 0.0
    %282 = vmatpush.xpose.msra.mxu0 0.0
    %283 = vmatpush.xpose.msra.mxu0 0.0
    %284 = vmatpush.xpose.msra.mxu0 %v267
    %285 = vmatmul.f32.gmra.mxu0 %v265
    %v286 = vpop.f32.mrf.mxu0
    %v287 = vadd.f32 0.0, %v286
    %288 = vdwg.mxu0
    %v289 = vsel %vm184, %v287, -inf
    %290 = vmax.xlane.f32.xlu0 %v289
    %v291 = vpop.xlane.xlu0 %290
    %v292 = vsub.f32 %v287, %v291
    %v293 = vmul.f32 %v292, 1.442695
    %v294 = vpow.pop %v293
    %v295 = vsel %vm184, %v294, 0.0
    %296 = vadd.xlane.f32.xlu0 %v295
    %v297 = vpop.xlane.xlu0 %296
    %298 = vrot.lane.b32.xlu0 %v175, 88
    %v299 = vpop.permute.xlu0 %298
    %v302 = vsel %vm184, %v294, 0
    %304 = vmatpush.msra.mxu0 0.0
    %305 = vmatpush.msra.mxu0 0.0
    %306 = vmatpush.msra.mxu0 0.0
    %307 = vmatpush.msra.mxu0 0.0
    %308 = vmatpush.msra.mxu0 0.0
    %309 = vmatpush.msra.mxu0 0.0
    %310 = vmatpush.msra.mxu0 0.0
    %311 = vmatpush.msra.mxu0 0.0
    %312 = vmatpush.msra.mxu0 0.0
    %313 = vmatpush.msra.mxu0 0.0
    %314 = vmatpush.msra.mxu0 0.0
    %315 = vmatpush.msra.mxu0 0.0
    %316 = vmatpush.msra.mxu0 0.0
    %317 = vmatpush.msra.mxu0 0.0
    %318 = vmatpush.msra.mxu0 0.0
    %319 = vmatpush.msra.mxu0 %v299
    %320 = vmatmul.f32.gmra.mxu0 %v302
    %v321 = vpop.f32.mrf.mxu0
    %v322 = vadd.f32 0.0, %v321
    %323 = vdwg.mxu0
    %v324 = vrcp.pop %v297
    %v325 = vmul.f32 %v297, %v324
    %v326 = vsub.f32 1.0, %v325
    %v327 = vmul.f32 %v324, %v326
    %v328 = vadd.f32 %v324, %v327
    %vm329 = vweird.f32 %v297
    %vm330 = vweird.f32 %v324
    %vm331 = vmor %vm329, %vm330
    %v332 = vsel %vm331, %v324, %v328
    %v333 = vand.u32 2147483647, %v297
    %vm334 = vcmp.eq.f32.partialorder %v333, 8.507059e+37
    %v335 = vand.u32 %v297, 2147483648
    %v336 = vor.u32 1.1754944e-38, %v335
    %v337 = vsel %vm334, %v336, %v332
    %v338 = vmul.f32 %v322, %v337
    %v340 = vsel %vm184, %v338, 0
    %342 = vmatpush.msra.mxu0 0.0
    %343 = vmatpush.msra.mxu0 0.0
    %344 = vmatpush.msra.mxu0 0.0
    %345 = vmatpush.msra.mxu0 0.0
    %346 = vmatpush.msra.mxu0 0.0
    %347 = vmatpush.msra.mxu0 0.0
    %348 = vmatpush.msra.mxu0 0.0
    %349 = vmatpush.msra.mxu0 0.0
    %350 = vmatpush.msra.mxu0 0.0
    %351 = vmatpush.msra.mxu0 0.0
    %352 = vmatpush.msra.mxu0 0.0
    %353 = vmatpush.msra.mxu0 0.0
    %354 = vmatpush.msra.mxu0 0.0
    %355 = vmatpush.msra.mxu0 0.0
    %356 = vmatpush.msra.mxu0 0.0
    %357 = vmatpush.msra.mxu0 %v181
    %358 = vmatmul.f32.gmra.mxu0 %v340
    %v359 = vpop.f32.mrf.mxu0
    %v360 = vadd.f32 0.0, %v359
    %361 = vdwg.mxu0
    %v363 = vsel %vm184, %v260, 0
    %365 = vmatpush.msra.mxu0 0.0
    %366 = vmatpush.msra.mxu0 0.0
    %367 = vmatpush.msra.mxu0 0.0
    %368 = vmatpush.msra.mxu0 0.0
    %369 = vmatpush.msra.mxu0 0.0
    %370 = vmatpush.msra.mxu0 0.0
    %371 = vmatpush.msra.mxu0 0.0
    %372 = vmatpush.msra.mxu0 0.0
    %373 = vmatpush.msra.mxu0 0.0
    %374 = vmatpush.msra.mxu0 0.0
    %375 = vmatpush.msra.mxu0 0.0
    %376 = vmatpush.msra.mxu0 0.0
    %377 = vmatpush.msra.mxu0 0.0
    %378 = vmatpush.msra.mxu0 0.0
    %379 = vmatpush.msra.mxu0 0.0
    %380 = vmatpush.msra.mxu0 %v180
    %381 = vmatmul.f32.gmra.mxu0 %v363
    %v382 = vpop.f32.mrf.mxu0
    %v383 = vadd.f32 %v360, %v382
    %384 = vdwg.mxu0
    %385 = vrot.lane.b32.xlu0 %v139, 112
    %v386 = vpop.permute.xlu0 %385
    %387 = vrot.lane.b32.xlu0 %v175, 112
    %v388 = vpop.permute.xlu0 %387
    %v389 = vsel %vm184, %v386, 0
    %v391 = vsel %vm184, %v388, 0
    %393 = vmatpush.xpose.msra.mxu0 0.0
    %394 = vmatpush.xpose.msra.mxu0 0.0
    %395 = vmatpush.xpose.msra.mxu0 0.0
    %396 = vmatpush.xpose.msra.mxu0 0.0
    %397 = vmatpush.xpose.msra.mxu0 0.0
    %398 = vmatpush.xpose.msra.mxu0 0.0
    %399 = vmatpush.xpose.msra.mxu0 0.0
    %400 = vmatpush.xpose.msra.mxu0 0.0
    %401 = vmatpush.xpose.msra.mxu0 0.0
    %402 = vmatpush.xpose.msra.mxu0 0.0
    %403 = vmatpush.xpose.msra.mxu0 0.0
    %404 = vmatpush.xpose.msra.mxu0 0.0
    %405 = vmatpush.xpose.msra.mxu0 0.0
    %406 = vmatpush.xpose.msra.mxu0 0.0
    %407 = vmatpush.xpose.msra.mxu0 0.0
    %408 = vmatpush.xpose.msra.mxu0 %v391
    %409 = vmatmul.f32.gmra.mxu0 %v389
    %v410 = vpop.f32.mrf.mxu0
    %v411 = vadd.f32 0.0, %v410
    %412 = vdwg.mxu0
    %v413 = vsel %vm184, %v411, -inf
    %414 = vmax.xlane.f32.xlu0 %v413
    %v415 = vpop.xlane.xlu0 %414
    %v416 = vsub.f32 %v411, %v415
    %v417 = vmul.f32 %v416, 1.442695
    %v418 = vpow.pop %v417
    %v419 = vsel %vm184, %v418, 0.0
    %420 = vadd.xlane.f32.xlu0 %v419
    %v421 = vpop.xlane.xlu0 %420
    %422 = vrot.lane.b32.xlu0 %v175, 80
    %v423 = vpop.permute.xlu0 %422
    %v426 = vsel %vm184, %v418, 0
    %428 = vmatpush.msra.mxu0 0.0
    %429 = vmatpush.msra.mxu0 0.0
    %430 = vmatpush.msra.mxu0 0.0
    %431 = vmatpush.msra.mxu0 0.0
    %432 = vmatpush.msra.mxu0 0.0
    %433 = vmatpush.msra.mxu0 0.0
    %434 = vmatpush.msra.mxu0 0.0
    %435 = vmatpush.msra.mxu0 0.0
    %436 = vmatpush.msra.mxu0 0.0
    %437 = vmatpush.msra.mxu0 0.0
    %438 = vmatpush.msra.mxu0 0.0
    %439 = vmatpush.msra.mxu0 0.0
    %440 = vmatpush.msra.mxu0 0.0
    %441 = vmatpush.msra.mxu0 0.0
    %442 = vmatpush.msra.mxu0 0.0
    %443 = vmatpush.msra.mxu0 %v423
    %444 = vmatmul.f32.gmra.mxu0 %v426
    %v445 = vpop.f32.mrf.mxu0
    %v446 = vadd.f32 0.0, %v445
    %447 = vdwg.mxu0
    %v448 = vrcp.pop %v421
    %v449 = vmul.f32 %v421, %v448
    %v450 = vsub.f32 1.0, %v449
    %v451 = vmul.f32 %v448, %v450
    %v452 = vadd.f32 %v448, %v451
    %vm453 = vweird.f32 %v421
    %vm454 = vweird.f32 %v448
    %vm455 = vmor %vm453, %vm454
    %v456 = vsel %vm455, %v448, %v452
    %v457 = vand.u32 2147483647, %v421
    %vm458 = vcmp.eq.f32.partialorder %v457, 8.507059e+37
    %v459 = vand.u32 %v421, 2147483648
    %v460 = vor.u32 1.1754944e-38, %v459
    %v461 = vsel %vm458, %v460, %v456
    %v462 = vmul.f32 %v446, %v461
    %v464 = vsel %vm184, %v462, 0
    %466 = vmatpush.msra.mxu0 0.0
    %467 = vmatpush.msra.mxu0 0.0
    %468 = vmatpush.msra.mxu0 0.0
    %469 = vmatpush.msra.mxu0 0.0
    %470 = vmatpush.msra.mxu0 0.0
    %471 = vmatpush.msra.mxu0 0.0
    %472 = vmatpush.msra.mxu0 0.0
    %473 = vmatpush.msra.mxu0 0.0
    %474 = vmatpush.msra.mxu0 0.0
    %475 = vmatpush.msra.mxu0 0.0
    %476 = vmatpush.msra.mxu0 0.0
    %477 = vmatpush.msra.mxu0 0.0
    %478 = vmatpush.msra.mxu0 0.0
    %479 = vmatpush.msra.mxu0 0.0
    %480 = vmatpush.msra.mxu0 0.0
    %481 = vmatpush.msra.mxu0 %v182
    %482 = vmatmul.f32.gmra.mxu0 %v464
    %v483 = vpop.f32.mrf.mxu0
    %v484 = vadd.f32 0.0, %v483
    %485 = vdwg.mxu0
    %v486 = vadd.f32 %v383, %v484
    %487 = vrot.lane.b32.xlu0 %v139, 104
    %v488 = vpop.permute.xlu0 %487
    %489 = vrot.lane.b32.xlu0 %v175, 104
    %v490 = vpop.permute.xlu0 %489
    %v491 = vsel %vm184, %v488, 0
    %v493 = vsel %vm184, %v490, 0
    %495 = vmatpush.xpose.msra.mxu0 0.0
    %496 = vmatpush.xpose.msra.mxu0 0.0
    %497 = vmatpush.xpose.msra.mxu0 0.0
    %498 = vmatpush.xpose.msra.mxu0 0.0
    %499 = vmatpush.xpose.msra.mxu0 0.0
    %500 = vmatpush.xpose.msra.mxu0 0.0
    %501 = vmatpush.xpose.msra.mxu0 0.0
    %502 = vmatpush.xpose.msra.mxu0 0.0
    %503 = vmatpush.xpose.msra.mxu0 0.0
    %504 = vmatpush.xpose.msra.mxu0 0.0
    %505 = vmatpush.xpose.msra.mxu0 0.0
    %506 = vmatpush.xpose.msra.mxu0 0.0
    %507 = vmatpush.xpose.msra.mxu0 0.0
    %508 = vmatpush.xpose.msra.mxu0 0.0
    %509 = vmatpush.xpose.msra.mxu0 0.0
    %510 = vmatpush.xpose.msra.mxu0 %v493
    %511 = vmatmul.f32.gmra.mxu0 %v491
    %v512 = vpop.f32.mrf.mxu0
    %v513 = vadd.f32 0.0, %v512
    %514 = vdwg.mxu0
    %v515 = vsel %vm184, %v513, -inf
    %516 = vmax.xlane.f32.xlu0 %v515
    %v517 = vpop.xlane.xlu0 %516
    %v518 = vsub.f32 %v513, %v517
    %v519 = vmul.f32 %v518, 1.442695
    %v520 = vpow.pop %v519
    %v521 = vsel %vm184, %v520, 0.0
    %522 = vadd.xlane.f32.xlu0 %v521
    %v523 = vpop.xlane.xlu0 %522
    %524 = vrot.lane.b32.xlu0 %v175, 72
    %v525 = vpop.permute.xlu0 %524
    %v528 = vsel %vm184, %v520, 0
    %530 = vmatpush.msra.mxu0 0.0
    %531 = vmatpush.msra.mxu0 0.0
    %532 = vmatpush.msra.mxu0 0.0
    %533 = vmatpush.msra.mxu0 0.0
    %534 = vmatpush.msra.mxu0 0.0
    %535 = vmatpush.msra.mxu0 0.0
    %536 = vmatpush.msra.mxu0 0.0
    %537 = vmatpush.msra.mxu0 0.0
    %538 = vmatpush.msra.mxu0 0.0
    %539 = vmatpush.msra.mxu0 0.0
    %540 = vmatpush.msra.mxu0 0.0
    %541 = vmatpush.msra.mxu0 0.0
    %542 = vmatpush.msra.mxu0 0.0
    %543 = vmatpush.msra.mxu0 0.0
    %544 = vmatpush.msra.mxu0 0.0
    %545 = vmatpush.msra.mxu0 %v525
    %546 = vmatmul.f32.gmra.mxu0 %v528
    %v547 = vpop.f32.mrf.mxu0
    %v548 = vadd.f32 0.0, %v547
    %549 = vdwg.mxu0
    %v550 = vrcp.pop %v523
    %v551 = vmul.f32 %v523, %v550
    %v552 = vsub.f32 1.0, %v551
    %v553 = vmul.f32 %v550, %v552
    %v554 = vadd.f32 %v550, %v553
    %vm555 = vweird.f32 %v523
    %vm556 = vweird.f32 %v550
    %vm557 = vmor %vm555, %vm556
    %v558 = vsel %vm557, %v550, %v554
    %v559 = vand.u32 2147483647, %v523
    %vm560 = vcmp.eq.f32.partialorder %v559, 8.507059e+37
    %v561 = vand.u32 %v523, 2147483648
    %v562 = vor.u32 1.1754944e-38, %v561
    %v563 = vsel %vm560, %v562, %v558
    %v564 = vmul.f32 %v548, %v563
    %v566 = vsel %vm184, %v564, 0
    %568 = vmatpush.msra.mxu0 0.0
    %569 = vmatpush.msra.mxu0 0.0
    %570 = vmatpush.msra.mxu0 0.0
    %571 = vmatpush.msra.mxu0 0.0
    %572 = vmatpush.msra.mxu0 0.0
    %573 = vmatpush.msra.mxu0 0.0
    %574 = vmatpush.msra.mxu0 0.0
    %575 = vmatpush.msra.mxu0 0.0
    %576 = vmatpush.msra.mxu0 0.0
    %577 = vmatpush.msra.mxu0 0.0
    %578 = vmatpush.msra.mxu0 0.0
    %579 = vmatpush.msra.mxu0 0.0
    %580 = vmatpush.msra.mxu0 0.0
    %581 = vmatpush.msra.mxu0 0.0
    %582 = vmatpush.msra.mxu0 0.0
    %583 = vmatpush.msra.mxu0 %v183
    %584 = vmatmul.f32.gmra.mxu0 %v566
    %v585 = vpop.f32.mrf.mxu0
    %v586 = vadd.f32 0.0, %v585
    %587 = vdwg.mxu0
    %v588 = vadd.f32 %v486, %v586
    %589 = vrot.lane.b32.xlu0 %v112, 32
    %v590 = vpop.permute.xlu0 %589
    %v592 = vadd.f32 %v588, %v590
    %593 = vst.msk [vmem:[#allocation11] sm:$0xff] %vm114, %v592
    %v595 = vsel %vm184, %v142, 0
    %v598 = vsel %vm184, %v178, 0
    %600 = vmatpush.xpose.msra.mxu0 0.0
    %601 = vmatpush.xpose.msra.mxu0 0.0
    %602 = vmatpush.xpose.msra.mxu0 0.0
    %603 = vmatpush.xpose.msra.mxu0 0.0
    %604 = vmatpush.xpose.msra.mxu0 0.0
    %605 = vmatpush.xpose.msra.mxu0 0.0
    %606 = vmatpush.xpose.msra.mxu0 0.0
    %607 = vmatpush.xpose.msra.mxu0 0.0
    %608 = vmatpush.xpose.msra.mxu0 0.0
    %609 = vmatpush.xpose.msra.mxu0 0.0
    %610 = vmatpush.xpose.msra.mxu0 0.0
    %611 = vmatpush.xpose.msra.mxu0 0.0
    %612 = vmatpush.xpose.msra.mxu0 0.0
    %613 = vmatpush.xpose.msra.mxu0 0.0
    %614 = vmatpush.xpose.msra.mxu0 0.0
    %615 = vmatpush.xpose.msra.mxu0 %v598
    %616 = vmatmul.f32.gmra.mxu0 %v595
    %v617 = vpop.f32.mrf.mxu0
    %v618 = vadd.f32 0.0, %v617
    %619 = vdwg.mxu0
    %v620 = vsel %vm184, %v618, -inf
    %621 = vmax.xlane.f32.xlu0 %v620
    %v622 = vpop.xlane.xlu0 %621
    %v623 = vsub.f32 %v618, %v622
    %v624 = vmul.f32 %v623, 1.442695
    %v625 = vpow.pop %v624
    %v626 = vsel %vm184, %v625, 0.0
    %627 = vadd.xlane.f32.xlu0 %v626
    %v628 = vpop.xlane.xlu0 %627
    %629 = vrot.lane.b32.xlu0 %v178, 96
    %v630 = vpop.permute.xlu0 %629
    %v633 = vsel %vm184, %v625, 0
    %635 = vmatpush.msra.mxu0 0.0
    %636 = vmatpush.msra.mxu0 0.0
    %637 = vmatpush.msra.mxu0 0.0
    %638 = vmatpush.msra.mxu0 0.0
    %639 = vmatpush.msra.mxu0 0.0
    %640 = vmatpush.msra.mxu0 0.0
    %641 = vmatpush.msra.mxu0 0.0
    %642 = vmatpush.msra.mxu0 0.0
    %643 = vmatpush.msra.mxu0 0.0
    %644 = vmatpush.msra.mxu0 0.0
    %645 = vmatpush.msra.mxu0 0.0
    %646 = vmatpush.msra.mxu0 0.0
    %647 = vmatpush.msra.mxu0 0.0
    %648 = vmatpush.msra.mxu0 0.0
    %649 = vmatpush.msra.mxu0 0.0
    %650 = vmatpush.msra.mxu0 %v630
    %651 = vmatmul.f32.gmra.mxu0 %v633
    %v652 = vpop.f32.mrf.mxu0
    %v653 = vadd.f32 0.0, %v652
    %654 = vdwg.mxu0
    %v655 = vrcp.pop %v628
    %v656 = vmul.f32 %v628, %v655
    %v657 = vsub.f32 1.0, %v656
    %v658 = vmul.f32 %v655, %v657
    %v659 = vadd.f32 %v655, %v658
    %vm660 = vweird.f32 %v628
    %vm661 = vweird.f32 %v655
    %vm662 = vmor %vm660, %vm661
    %v663 = vsel %vm662, %v655, %v659
    %v664 = vand.u32 2147483647, %v628
    %vm665 = vcmp.eq.f32.partialorder %v664, 8.507059e+37
    %v666 = vand.u32 %v628, 2147483648
    %v667 = vor.u32 1.1754944e-38, %v666
    %v668 = vsel %vm665, %v667, %v663
    %v669 = vmul.f32 %v653, %v668
    %670 = vrot.lane.b32.xlu0 %v142, 120
    %v671 = vpop.permute.xlu0 %670
    %672 = vrot.lane.b32.xlu0 %v178, 120
    %v673 = vpop.permute.xlu0 %672
    %v674 = vsel %vm184, %v671, 0
    %v676 = vsel %vm184, %v673, 0
    %678 = vmatpush.xpose.msra.mxu0 0.0
    %679 = vmatpush.xpose.msra.mxu0 0.0
    %680 = vmatpush.xpose.msra.mxu0 0.0
    %681 = vmatpush.xpose.msra.mxu0 0.0
    %682 = vmatpush.xpose.msra.mxu0 0.0
    %683 = vmatpush.xpose.msra.mxu0 0.0
    %684 = vmatpush.xpose.msra.mxu0 0.0
    %685 = vmatpush.xpose.msra.mxu0 0.0
    %686 = vmatpush.xpose.msra.mxu0 0.0
    %687 = vmatpush.xpose.msra.mxu0 0.0
    %688 = vmatpush.xpose.msra.mxu0 0.0
    %689 = vmatpush.xpose.msra.mxu0 0.0
    %690 = vmatpush.xpose.msra.mxu0 0.0
    %691 = vmatpush.xpose.msra.mxu0 0.0
    %692 = vmatpush.xpose.msra.mxu0 0.0
    %693 = vmatpush.xpose.msra.mxu0 %v676
    %694 = vmatmul.f32.gmra.mxu0 %v674
    %v695 = vpop.f32.mrf.mxu0
    %v696 = vadd.f32 0.0, %v695
    %697 = vdwg.mxu0
    %v698 = vsel %vm184, %v696, -inf
    %699 = vmax.xlane.f32.xlu0 %v698
    %v700 = vpop.xlane.xlu0 %699
    %v701 = vsub.f32 %v696, %v700
    %v702 = vmul.f32 %v701, 1.442695
    %v703 = vpow.pop %v702
    %v704 = vsel %vm184, %v703, 0.0
    %705 = vadd.xlane.f32.xlu0 %v704
    %v706 = vpop.xlane.xlu0 %705
    %707 = vrot.lane.b32.xlu0 %v178, 88
    %v708 = vpop.permute.xlu0 %707
    %v711 = vsel %vm184, %v703, 0
    %713 = vmatpush.msra.mxu0 0.0
    %714 = vmatpush.msra.mxu0 0.0
    %715 = vmatpush.msra.mxu0 0.0
    %716 = vmatpush.msra.mxu0 0.0
    %717 = vmatpush.msra.mxu0 0.0
    %718 = vmatpush.msra.mxu0 0.0
    %719 = vmatpush.msra.mxu0 0.0
    %720 = vmatpush.msra.mxu0 0.0
    %721 = vmatpush.msra.mxu0 0.0
    %722 = vmatpush.msra.mxu0 0.0
    %723 = vmatpush.msra.mxu0 0.0
    %724 = vmatpush.msra.mxu0 0.0
    %725 = vmatpush.msra.mxu0 0.0
    %726 = vmatpush.msra.mxu0 0.0
    %727 = vmatpush.msra.mxu0 0.0
    %728 = vmatpush.msra.mxu0 %v708
    %729 = vmatmul.f32.gmra.mxu0 %v711
    %v730 = vpop.f32.mrf.mxu0
    %v731 = vadd.f32 0.0, %v730
    %732 = vdwg.mxu0
    %v733 = vrcp.pop %v706
    %v734 = vmul.f32 %v706, %v733
    %v735 = vsub.f32 1.0, %v734
    %v736 = vmul.f32 %v733, %v735
    %v737 = vadd.f32 %v733, %v736
    %vm738 = vweird.f32 %v706
    %vm739 = vweird.f32 %v733
    %vm740 = vmor %vm738, %vm739
    %v741 = vsel %vm740, %v733, %v737
    %v742 = vand.u32 2147483647, %v706
    %vm743 = vcmp.eq.f32.partialorder %v742, 8.507059e+37
    %v744 = vand.u32 %v706, 2147483648
    %v745 = vor.u32 1.1754944e-38, %v744
    %v746 = vsel %vm743, %v745, %v741
    %v747 = vmul.f32 %v731, %v746
    %v749 = vsel %vm184, %v747, 0
    %751 = vmatpush.msra.mxu0 0.0
    %752 = vmatpush.msra.mxu0 0.0
    %753 = vmatpush.msra.mxu0 0.0
    %754 = vmatpush.msra.mxu0 0.0
    %755 = vmatpush.msra.mxu0 0.0
    %756 = vmatpush.msra.mxu0 0.0
    %757 = vmatpush.msra.mxu0 0.0
    %758 = vmatpush.msra.mxu0 0.0
    %759 = vmatpush.msra.mxu0 0.0
    %760 = vmatpush.msra.mxu0 0.0
    %761 = vmatpush.msra.mxu0 0.0
    %762 = vmatpush.msra.mxu0 0.0
    %763 = vmatpush.msra.mxu0 0.0
    %764 = vmatpush.msra.mxu0 0.0
    %765 = vmatpush.msra.mxu0 0.0
    %766 = vmatpush.msra.mxu0 %v181
    %767 = vmatmul.f32.gmra.mxu0 %v749
    %v768 = vpop.f32.mrf.mxu0
    %v769 = vadd.f32 0.0, %v768
    %770 = vdwg.mxu0
    %v772 = vsel %vm184, %v669, 0
    %774 = vmatpush.msra.mxu0 0.0
    %775 = vmatpush.msra.mxu0 0.0
    %776 = vmatpush.msra.mxu0 0.0
    %777 = vmatpush.msra.mxu0 0.0
    %778 = vmatpush.msra.mxu0 0.0
    %779 = vmatpush.msra.mxu0 0.0
    %780 = vmatpush.msra.mxu0 0.0
    %781 = vmatpush.msra.mxu0 0.0
    %782 = vmatpush.msra.mxu0 0.0
    %783 = vmatpush.msra.mxu0 0.0
    %784 = vmatpush.msra.mxu0 0.0
    %785 = vmatpush.msra.mxu0 0.0
    %786 = vmatpush.msra.mxu0 0.0
    %787 = vmatpush.msra.mxu0 0.0
    %788 = vmatpush.msra.mxu0 0.0
    %789 = vmatpush.msra.mxu0 %v180
    %790 = vmatmul.f32.gmra.mxu0 %v772
    %v791 = vpop.f32.mrf.mxu0
    %v792 = vadd.f32 %v769, %v791
    %793 = vdwg.mxu0
    %794 = vrot.lane.b32.xlu0 %v142, 112
    %v795 = vpop.permute.xlu0 %794
    %796 = vrot.lane.b32.xlu0 %v178, 112
    %v797 = vpop.permute.xlu0 %796
    %v798 = vsel %vm184, %v795, 0
    %v800 = vsel %vm184, %v797, 0
    %802 = vmatpush.xpose.msra.mxu0 0.0
    %803 = vmatpush.xpose.msra.mxu0 0.0
    %804 = vmatpush.xpose.msra.mxu0 0.0
    %805 = vmatpush.xpose.msra.mxu0 0.0
    %806 = vmatpush.xpose.msra.mxu0 0.0
    %807 = vmatpush.xpose.msra.mxu0 0.0
    %808 = vmatpush.xpose.msra.mxu0 0.0
    %809 = vmatpush.xpose.msra.mxu0 0.0
    %810 = vmatpush.xpose.msra.mxu0 0.0
    %811 = vmatpush.xpose.msra.mxu0 0.0
    %812 = vmatpush.xpose.msra.mxu0 0.0
    %813 = vmatpush.xpose.msra.mxu0 0.0
    %814 = vmatpush.xpose.msra.mxu0 0.0
    %815 = vmatpush.xpose.msra.mxu0 0.0
    %816 = vmatpush.xpose.msra.mxu0 0.0
    %817 = vmatpush.xpose.msra.mxu0 %v800
    %818 = vmatmul.f32.gmra.mxu0 %v798
    %v819 = vpop.f32.mrf.mxu0
    %v820 = vadd.f32 0.0, %v819
    %821 = vdwg.mxu0
    %v822 = vsel %vm184, %v820, -inf
    %823 = vmax.xlane.f32.xlu0 %v822
    %v824 = vpop.xlane.xlu0 %823
    %v825 = vsub.f32 %v820, %v824
    %v826 = vmul.f32 %v825, 1.442695
    %v827 = vpow.pop %v826
    %v828 = vsel %vm184, %v827, 0.0
    %829 = vadd.xlane.f32.xlu0 %v828
    %v830 = vpop.xlane.xlu0 %829
    %831 = vrot.lane.b32.xlu0 %v178, 80
    %v832 = vpop.permute.xlu0 %831
    %v835 = vsel %vm184, %v827, 0
    %837 = vmatpush.msra.mxu0 0.0
    %838 = vmatpush.msra.mxu0 0.0
    %839 = vmatpush.msra.mxu0 0.0
    %840 = vmatpush.msra.mxu0 0.0
    %841 = vmatpush.msra.mxu0 0.0
    %842 = vmatpush.msra.mxu0 0.0
    %843 = vmatpush.msra.mxu0 0.0
    %844 = vmatpush.msra.mxu0 0.0
    %845 = vmatpush.msra.mxu0 0.0
    %846 = vmatpush.msra.mxu0 0.0
    %847 = vmatpush.msra.mxu0 0.0
    %848 = vmatpush.msra.mxu0 0.0
    %849 = vmatpush.msra.mxu0 0.0
    %850 = vmatpush.msra.mxu0 0.0
    %851 = vmatpush.msra.mxu0 0.0
    %852 = vmatpush.msra.mxu0 %v832
    %853 = vmatmul.f32.gmra.mxu0 %v835
    %v854 = vpop.f32.mrf.mxu0
    %v855 = vadd.f32 0.0, %v854
    %856 = vdwg.mxu0
    %v857 = vrcp.pop %v830
    %v858 = vmul.f32 %v830, %v857
    %v859 = vsub.f32 1.0, %v858
    %v860 = vmul.f32 %v857, %v859
    %v861 = vadd.f32 %v857, %v860
    %vm862 = vweird.f32 %v830
    %vm863 = vweird.f32 %v857
    %vm864 = vmor %vm862, %vm863
    %v865 = vsel %vm864, %v857, %v861
    %v866 = vand.u32 2147483647, %v830
    %vm867 = vcmp.eq.f32.partialorder %v866, 8.507059e+37
    %v868 = vand.u32 %v830, 2147483648
    %v869 = vor.u32 1.1754944e-38, %v868
    %v870 = vsel %vm867, %v869, %v865
    %v871 = vmul.f32 %v855, %v870
    %v873 = vsel %vm184, %v871, 0
    %875 = vmatpush.msra.mxu0 0.0
    %876 = vmatpush.msra.mxu0 0.0
    %877 = vmatpush.msra.mxu0 0.0
    %878 = vmatpush.msra.mxu0 0.0
    %879 = vmatpush.msra.mxu0 0.0
    %880 = vmatpush.msra.mxu0 0.0
    %881 = vmatpush.msra.mxu0 0.0
    %882 = vmatpush.msra.mxu0 0.0
    %883 = vmatpush.msra.mxu0 0.0
    %884 = vmatpush.msra.mxu0 0.0
    %885 = vmatpush.msra.mxu0 0.0
    %886 = vmatpush.msra.mxu0 0.0
    %887 = vmatpush.msra.mxu0 0.0
    %888 = vmatpush.msra.mxu0 0.0
    %889 = vmatpush.msra.mxu0 0.0
    %890 = vmatpush.msra.mxu0 %v182
    %891 = vmatmul.f32.gmra.mxu0 %v873
    %v892 = vpop.f32.mrf.mxu0
    %v893 = vadd.f32 0.0, %v892
    %894 = vdwg.mxu0
    %v895 = vadd.f32 %v792, %v893
    %896 = vrot.lane.b32.xlu0 %v142, 104
    %v897 = vpop.permute.xlu0 %896
    %898 = vrot.lane.b32.xlu0 %v178, 104
    %v899 = vpop.permute.xlu0 %898
    %v900 = vsel %vm184, %v897, 0
    %v902 = vsel %vm184, %v899, 0
    %904 = vmatpush.xpose.msra.mxu0 0.0
    %905 = vmatpush.xpose.msra.mxu0 0.0
    %906 = vmatpush.xpose.msra.mxu0 0.0
    %907 = vmatpush.xpose.msra.mxu0 0.0
    %908 = vmatpush.xpose.msra.mxu0 0.0
    %909 = vmatpush.xpose.msra.mxu0 0.0
    %910 = vmatpush.xpose.msra.mxu0 0.0
    %911 = vmatpush.xpose.msra.mxu0 0.0
    %912 = vmatpush.xpose.msra.mxu0 0.0
    %913 = vmatpush.xpose.msra.mxu0 0.0
    %914 = vmatpush.xpose.msra.mxu0 0.0
    %915 = vmatpush.xpose.msra.mxu0 0.0
    %916 = vmatpush.xpose.msra.mxu0 0.0
    %917 = vmatpush.xpose.msra.mxu0 0.0
    %918 = vmatpush.xpose.msra.mxu0 0.0
    %919 = vmatpush.xpose.msra.mxu0 %v902
    %920 = vmatmul.f32.gmra.mxu0 %v900
    %v921 = vpop.f32.mrf.mxu0
    %v922 = vadd.f32 0.0, %v921
    %923 = vdwg.mxu0
    %v924 = vsel %vm184, %v922, -inf
    %925 = vmax.xlane.f32.xlu0 %v924
    %v926 = vpop.xlane.xlu0 %925
    %v927 = vsub.f32 %v922, %v926
    %v928 = vmul.f32 %v927, 1.442695
    %v929 = vpow.pop %v928
    %v930 = vsel %vm184, %v929, 0.0
    %931 = vadd.xlane.f32.xlu0 %v930
    %v932 = vpop.xlane.xlu0 %931
    %933 = vrot.lane.b32.xlu0 %v178, 72
    %v934 = vpop.permute.xlu0 %933
    %v937 = vsel %vm184, %v929, 0
    %939 = vmatpush.msra.mxu0 0.0
    %940 = vmatpush.msra.mxu0 0.0
    %941 = vmatpush.msra.mxu0 0.0
    %942 = vmatpush.msra.mxu0 0.0
    %943 = vmatpush.msra.mxu0 0.0
    %944 = vmatpush.msra.mxu0 0.0
    %945 = vmatpush.msra.mxu0 0.0
    %946 = vmatpush.msra.mxu0 0.0
    %947 = vmatpush.msra.mxu0 0.0
    %948 = vmatpush.msra.mxu0 0.0
    %949 = vmatpush.msra.mxu0 0.0
    %950 = vmatpush.msra.mxu0 0.0
    %951 = vmatpush.msra.mxu0 0.0
    %952 = vmatpush.msra.mxu0 0.0
    %953 = vmatpush.msra.mxu0 0.0
    %954 = vmatpush.msra.mxu0 %v934
    %955 = vmatmul.f32.gmra.mxu0 %v937
    %v956 = vpop.f32.mrf.mxu0
    %v957 = vadd.f32 0.0, %v956
    %958 = vdwg.mxu0
    %v959 = vrcp.pop %v932
    %v960 = vmul.f32 %v932, %v959
    %v961 = vsub.f32 1.0, %v960
    %v962 = vmul.f32 %v959, %v961
    %v963 = vadd.f32 %v959, %v962
    %vm964 = vweird.f32 %v932
    %vm965 = vweird.f32 %v959
    %vm966 = vmor %vm964, %vm965
    %v967 = vsel %vm966, %v959, %v963
    %v968 = vand.u32 2147483647, %v932
    %vm969 = vcmp.eq.f32.partialorder %v968, 8.507059e+37
    %v970 = vand.u32 %v932, 2147483648
    %v971 = vor.u32 1.1754944e-38, %v970
    %v972 = vsel %vm969, %v971, %v967
    %v973 = vmul.f32 %v957, %v972
    %v975 = vsel %vm184, %v973, 0
    %977 = vmatpush.msra.mxu0 0.0
    %978 = vmatpush.msra.mxu0 0.0
    %979 = vmatpush.msra.mxu0 0.0
    %980 = vmatpush.msra.mxu0 0.0
    %981 = vmatpush.msra.mxu0 0.0
    %982 = vmatpush.msra.mxu0 0.0
    %983 = vmatpush.msra.mxu0 0.0
    %984 = vmatpush.msra.mxu0 0.0
    %985 = vmatpush.msra.mxu0 0.0
    %986 = vmatpush.msra.mxu0 0.0
    %987 = vmatpush.msra.mxu0 0.0
    %988 = vmatpush.msra.mxu0 0.0
    %989 = vmatpush.msra.mxu0 0.0
    %990 = vmatpush.msra.mxu0 0.0
    %991 = vmatpush.msra.mxu0 0.0
    %992 = vmatpush.msra.mxu0 %v183
    %993 = vmatmul.f32.gmra.mxu0 %v975
    %v994 = vpop.f32.mrf.mxu0
    %v995 = vadd.f32 0.0, %v994
    %996 = vdwg.mxu0
    %v997 = vadd.f32 %v895, %v995
    %v998 = vadd.f32 %v997, %v590
    %s999 = scalar_lea.vmem [#allocation11], 8
    %1000 = vst.msk [vmem:[%s999] sm:$0xff] %vm114, %v998
    // Predicated region
    $region46: #{tpu_custom_call.1} parent=1 // pred_check
      _
    $region47: #{tpu_custom_call.1} parent=1 // pred_check_branch
      %1002 = sbr.rel (0) target = $region49
    $region48: #{tpu_custom_call.1} parent=1 // pred_region
      %1004 = vsyncadd [#allocation4], 0
      %s1005 = sshll.u32 [#allocation11], 4
      %s1006 = int_to_ptr.vmem [resolvable:$true] %s1005
      %s1007 = sshll.u32 %s6, 4
      %s1008 = int_to_ptr.hbm [resolvable:$true] %s1007
      %1013 = dma.vmem_to_hbm [thread:$0]  %s1006, 256, %s1008, [#allocation4], 128, 128, 8
    $region49: #{tpu_custom_call.1} parent=1 // pred_fallthru
      _
    // Predicated region
    $region50: #{tpu_custom_call.1} parent=1 // pred_check
      _
    $region51: #{tpu_custom_call.1} parent=1 // pred_check_branch
      %1015 = sbr.rel (0) target = $region53
    $region52: #{tpu_custom_call.1} parent=1 // pred_region
      %1017 = dma.done [#allocation4], 256
    $region53: #{tpu_custom_call.1} parent=1 // pred_fallthru
      _
    %1018 = vsyncpa [#allocation3], 1
    %1019 = vsyncpa [#allocation6], 1
    %1020 = vsyncpa [#allocation9], 1
    %1021 = vsyncpa [#allocation4], 1

</llo_original>
